<compile_context>
chip_gen: v7x
topology: tpu7x:2x2x1
jax: 0.10.0
libtpu: 0.0.40
codegen_flags: <defaults>
</compile_context>

<pallas_src>
import functools
import math

import jax
import jax.numpy as jnp
from jax.experimental import pallas as pl
from jax.experimental.pallas import tpu as pltpu

_MiB = 1024 * 1024


def _round_up(v, m):
    return ((v + m - 1) // m) * m


def _tpu_budget():
    """(buffer_budget_bytes, vmem_limit_bytes, num_tensorcores) for this chip."""
    vmem_cap = 0
    try:
        vmem_cap = int(pltpu.get_tpu_info().vmem_capacity_bytes)
    except Exception:
        vmem_cap = 0
    if vmem_cap >= 100 * _MiB:
        # v5e / v6e: 128 MiB physical VMEM, 1 TensorCore per chip.
        return 48 * _MiB, 88 * _MiB, 1
    # v7x: 64 MiB VMEM per TensorCore, 2 TensorCores per chip.
    # (Also the safe fallback when the hardware query is unavailable.)
    return 24 * _MiB, 48 * _MiB, 2


def _pick_seq_tile(s_rows, kd, itemsize, budget_bytes, min_tiles):
    """Rows per sequence tile: balanced across grid steps, multiple of 8, resident VMEM
    (2x in + 2x out in x.dtype, f32 emb scratch, ~2 f32 temporaries) within budget."""
    per_row = (4 * int(itemsize) + 4 + 8) * kd
    max_rows = max(8, budget_bytes // per_row)
    if s_rows <= 8:
        return s_rows                      # single full-extent tile (always legal)
    n_tiles = max(pl.cdiv(s_rows, max_rows), min_tiles)
    n_tiles = max(1, min(n_tiles, s_rows // 8))   # each tile at least 8 rows
    if n_tiles <= 1:
        return s_rows
    ts = _round_up(pl.cdiv(s_rows, n_tiles), 8)   # balanced ragged tiles
    ts = min(ts, (max_rows // 8) * 8)             # respect the VMEM budget
    return max(8, min(ts, s_rows))


def _sincos_add_kernel(x_ref, f_ref, p_ref, o_ref, emb_ref, *, k):
    # x_ref / o_ref: (TS, KD) tile of ONE batch element (batch dim squeezed).
    # f_ref / p_ref: (1, KD) f32 per-column frequency / (group*freq + phase) rows.
    # emb_ref: persistent (TS, KD) f32 VMEM scratch with the positional tile.
    s_idx = pl.program_id(0)   # sequence-tile index (outer, "parallel")
    b_idx = pl.program_id(1)   # batch index (inner, MUST stay sequential/"arbitrary")
    TS = x_ref.shape[0]

    @pl.when(b_idx == 0)
    def _():
        # Positional tile depends only on the sequence tile: compute once, reuse for
        # b = 1..B-1.  base position (in the ungrouped sequence) of each grouped row.
        row = jax.lax.broadcasted_iota(jnp.int32, (TS, 1), 0) + s_idx * TS
        base_pos = (row * k).astype(jnp.float32)                 # (TS, 1)
        emb = jnp.sin(base_pos * f_ref[...] + p_ref[...])        # (TS, KD), one sin/elem
        emb_ref[...] = emb
        # Use the freshly computed value directly (no store->load round trip).
        o_ref[...] = (x_ref[...].astype(jnp.float32) + emb).astype(o_ref.dtype)

    @pl.when(b_idx != 0)
    def _():
        o_ref[...] = (x_ref[...].astype(jnp.float32) + emb_ref[...]).astype(o_ref.dtype)


def sinusoidal_position_embedding_add(x, *, donate_input=False, _tile_rows_override=None):
    """Pallas TPU implementation of SinusoidalPositionEmbedding(merge_mode='add')."""
    B, S, D = x.shape
    assert D % 2 == 0, "output_dim must be even"

    # Lane-dense grouping: fold k sequence rows into the feature axis so the last dim
    # is a multiple of 128.  Free row-major reshape; fall back to k=1 if S % k != 0.
    k = 128 // math.gcd(D, 128)
    if k > 1 and S % k != 0:
        k = 1   # TODO(synk): could pad S in the wrapper to keep lane-dense layout here.
    KD = k * D
    Sg = S // k
    xg = x.reshape(B, Sg, KD)

    # Per-column constants of the grouped layout (tiny (1, KD) f32 rows):
    #   angle[row, col] = (row*k)*freq(c) + [g*freq(c) + phase(c)],  c = col % D, g = col // D
    col = jnp.arange(KD, dtype=jnp.int32)
    c = col % D
    g = (col // D).astype(jnp.float32)
    half = (c // 2).astype(jnp.float32)
    freq = jnp.power(10000.0, -2.0 * half / D).astype(jnp.float32)
    phase = (c % 2).astype(jnp.float32) * jnp.float32(math.pi / 2.0)  # cos(x)=sin(x+pi/2)
    f_row = freq.reshape(1, KD)
    p_row = (g * freq + phase).reshape(1, KD).astype(jnp.float32)

    budget, vmem_limit, cores = _tpu_budget()
    min_tiles = 2 * cores if cores > 1 else 1   # keep both v7x TensorCores busy
    if _tile_rows_override is not None:
        TS = int(_tile_rows_override)
    else:
        TS = _pick_seq_tile(Sg, KD, x.dtype.itemsize, budget, min_tiles)
    n_s = pl.cdiv(Sg, TS)

    kern = functools.partial(_sincos_add_kernel, k=k)
    out = pl.pallas_call(
        kern,
        out_shape=jax.ShapeDtypeStruct((B, Sg, KD), x.dtype),
        grid_spec=pltpu.PrefetchScalarGridSpec(
            num_scalar_prefetch=0,
            grid=(n_s, B),   # seq tiles outer ("parallel"), batch inner ("arbitrary")
            in_specs=[
                pl.BlockSpec((pl.Squeezed(), TS, KD), lambda s, b: (b, s, 0)),
                pl.BlockSpec((1, KD), lambda s, b: (0, 0)),
                pl.BlockSpec((1, KD), lambda s, b: (0, 0)),
            ],
            out_specs=pl.BlockSpec((pl.Squeezed(), TS, KD), lambda s, b: (b, s, 0)),
            scratch_shapes=[pltpu.VMEM((TS, KD), jnp.float32)],
        ),
        compiler_params=pltpu.CompilerParams(
            dimension_semantics=("parallel", "arbitrary"),
            vmem_limit_bytes=vmem_limit,
        ),
        cost_estimate=pl.CostEstimate(
            flops=2 * B * S * D,
            transcendentals=S * D,   # positional tile computed once per seq tile
            bytes_accessed=2 * B * S * D * x.dtype.itemsize,
        ),
        input_output_aliases=({0: 0} if donate_input else {}),
    )(xg, f_row, p_row)
    return out.reshape(B, S, D)


def _reference(x):
    # Plain-JAX mirror of the PyTorch forward (merge_mode='add').
    B, S, D = x.shape
    position_ids = jnp.arange(S, dtype=jnp.float32)[None]            # (1, S)
    indices = jnp.arange(D // 2, dtype=jnp.float32)
    indices = jnp.power(10000.0, -2.0 * indices / D)                  # (D/2,)
    emb = jnp.einsum("bn,d->bnd", position_ids, indices)              # (1, S, D/2)
    emb = jnp.stack([jnp.sin(emb), jnp.cos(emb)], axis=-1)            # (1, S, D/2, 2)
    emb = jnp.reshape(emb, (-1, S, D))                                # (1, S, D)
    return x + emb


if __name__ == "__main__":
    key = jax.random.PRNGKey(0)

    # Primary small test (module-consistent shape): batch=2, seq=8, hidden=32.
    B, S, D = 2, 8, 32
    x = jax.random.normal(key, (B, S, D), dtype=jnp.float32)
    out = jax.block_until_ready(sinusoidal_position_embedding_add(x))
    assert out.shape == (B, S, D)
    assert jnp.allclose(out, _reference(x), atol=1e-5, rtol=1e-5)

    # Extra coverage: non-power-of-two D with lane-dense grouping (k=8).
    x2 = jax.random.normal(jax.random.PRNGKey(1), (3, 40, 48), dtype=jnp.float32)
    out2 = jax.block_until_ready(sinusoidal_position_embedding_add(x2))
    assert jnp.allclose(out2, _reference(x2), atol=1e-5, rtol=1e-5)

    # Extra coverage: multiple sequence tiles with a ragged last tile (forced TS=16).
    x3 = jax.random.normal(jax.random.PRNGKey(2), (2, 40, 256), dtype=jnp.float32)
    out3 = jax.block_until_ready(
        sinusoidal_position_embedding_add(x3, _tile_rows_override=16))
    assert jnp.allclose(out3, _reference(x3), atol=1e-5, rtol=1e-5)

    print("KERNEL_OK")
</pallas_src>

<mosaic_0001>
module attributes {stable_mosaic.version = 11 : i64} {
  func.func @_sincos_add_kernel(%arg0: i32, %arg1: i32, %arg2: memref<1x2x128xf32, #tpu.memory_space<vmem>>, %arg3: memref<1x128xf32, #tpu.memory_space<vmem>>, %arg4: memref<1x128xf32, #tpu.memory_space<vmem>>, %arg5: memref<1x2x128xf32, #tpu.memory_space<vmem>>, %arg6: memref<2x128xf32, #tpu.memory_space<vmem>>) attributes {dimension_semantics = [#tpu.dimension_semantics<parallel>, #tpu.dimension_semantics<arbitrary>], iteration_bounds = array<i64: 1, 2>, scalar_prefetch = 0 : i64, scratch_operands = 1 : i64, tpu.core_type = #tpu.core_type<tc>, window_params = [{transform_indices = @transform_0, window_bounds = array<i64: 1, 2, 128>}, {pipeline_mode = #tpu.pipeline_mode<synchronous>, transform_indices = @transform_1, window_bounds = array<i64: 1, 128>}, {pipeline_mode = #tpu.pipeline_mode<synchronous>, transform_indices = @transform_2, window_bounds = array<i64: 1, 128>}, {transform_indices = @transform_3, window_bounds = array<i64: 1, 2, 128>}]} {
    %c0_i32 = arith.constant 0 : i32
    %0 = arith.cmpi eq, %arg1, %c0_i32 : i32
    %1 = arith.extui %0 : i1 to i32
    %c0_i32_0 = arith.constant 0 : i32
    %2 = arith.cmpi ne, %1, %c0_i32_0 : i32
    scf.if %2 {
      %6 = tpu.iota {dimensions = array<i32: 0>} : vector<2x1xi32>
      %c2_i32 = arith.constant 2 : i32
      %7 = arith.muli %arg0, %c2_i32 : i32
      %8 = vector.broadcast %7 : i32 to vector<2x1xi32>
      %9 = arith.addi %6, %8 : vector<2x1xi32>
      %c4_i32 = arith.constant 4 : i32
      %10 = vector.broadcast %c4_i32 : i32 to vector<2x1xi32>
      %11 = arith.muli %9, %10 : vector<2x1xi32>
      %12 = arith.sitofp %11 : vector<2x1xi32> to vector<2x1xf32>
      %c0 = arith.constant 0 : index
      %c0_3 = arith.constant 0 : index
      %13 = vector.load %arg3[%c0, %c0_3] : memref<1x128xf32, #tpu.memory_space<vmem>>, vector<1x128xf32>
      %14 = vector.broadcast %12 : vector<2x1xf32> to vector<2x128xf32>
      %15 = vector.broadcast %13 : vector<1x128xf32> to vector<2x128xf32>
      %16 = arith.mulf %14, %15 : vector<2x128xf32>
      %c0_4 = arith.constant 0 : index
      %c0_5 = arith.constant 0 : index
      %17 = vector.load %arg4[%c0_4, %c0_5] : memref<1x128xf32, #tpu.memory_space<vmem>>, vector<1x128xf32>
      %18 = vector.broadcast %17 : vector<1x128xf32> to vector<2x128xf32>
      %19 = arith.addf %16, %18 : vector<2x128xf32>
      %20 = math.sin %19 : vector<2x128xf32>
      %c0_6 = arith.constant 0 : index
      %c0_7 = arith.constant 0 : index
      %21 = vector.load %arg6[%c0_6, %c0_7] : memref<2x128xf32, #tpu.memory_space<vmem>>, vector<2x128xf32>
      tpu.vector_store %arg6[%c0_6, %c0_7], %20 {strides = array<i32>} : memref<2x128xf32, #tpu.memory_space<vmem>>, vector<2x128xf32>,
      %c0_8 = arith.constant 0 : index
      %c0_9 = arith.constant 0 : index
      %c0_10 = arith.constant 0 : index
      %22 = vector.load %arg2[%c0_8, %c0_9, %c0_10] : memref<1x2x128xf32, #tpu.memory_space<vmem>>, vector<1x2x128xf32>
      %23 = vector.shape_cast %22 : vector<1x2x128xf32> to vector<2x128xf32>
      %24 = arith.addf %23, %20 : vector<2x128xf32>
      %c0_11 = arith.constant 0 : index
      %c0_12 = arith.constant 0 : index
      %c0_13 = arith.constant 0 : index
      %25 = vector.load %arg5[%c0_11, %c0_12, %c0_13] : memref<1x2x128xf32, #tpu.memory_space<vmem>>, vector<1x2x128xf32>
      %26 = vector.shape_cast %25 : vector<1x2x128xf32> to vector<2x128xf32>
      %27 = vector.shape_cast %24 : vector<2x128xf32> to vector<1x2x128xf32>
      tpu.vector_store %arg5[%c0_11, %c0_12, %c0_13], %27 {strides = array<i32>} : memref<1x2x128xf32, #tpu.memory_space<vmem>>, vector<1x2x128xf32>,
    } else {
    }
    %c0_i32_1 = arith.constant 0 : i32
    %3 = arith.cmpi ne, %arg1, %c0_i32_1 : i32
    %4 = arith.extui %3 : i1 to i32
    %c0_i32_2 = arith.constant 0 : i32
    %5 = arith.cmpi ne, %4, %c0_i32_2 : i32
    scf.if %5 {
      %c0 = arith.constant 0 : index
      %c0_3 = arith.constant 0 : index
      %c0_4 = arith.constant 0 : index
      %6 = vector.load %arg2[%c0, %c0_3, %c0_4] : memref<1x2x128xf32, #tpu.memory_space<vmem>>, vector<1x2x128xf32>
      %7 = vector.shape_cast %6 : vector<1x2x128xf32> to vector<2x128xf32>
      %c0_5 = arith.constant 0 : index
      %c0_6 = arith.constant 0 : index
      %8 = vector.load %arg6[%c0_5, %c0_6] : memref<2x128xf32, #tpu.memory_space<vmem>>, vector<2x128xf32>
      %9 = arith.addf %7, %8 : vector<2x128xf32>
      %c0_7 = arith.constant 0 : index
      %c0_8 = arith.constant 0 : index
      %c0_9 = arith.constant 0 : index
      %10 = vector.load %arg5[%c0_7, %c0_8, %c0_9] : memref<1x2x128xf32, #tpu.memory_space<vmem>>, vector<1x2x128xf32>
      %11 = vector.shape_cast %10 : vector<1x2x128xf32> to vector<2x128xf32>
      %12 = vector.shape_cast %9 : vector<2x128xf32> to vector<1x2x128xf32>
      tpu.vector_store %arg5[%c0_7, %c0_8, %c0_9], %12 {strides = array<i32>} : memref<1x2x128xf32, #tpu.memory_space<vmem>>, vector<1x2x128xf32>,
    } else {
    }
    return
  }
  func.func @transform_0(%arg0: i32, %arg1: i32) -> (i32, i32, i32) {
    %c0_i32 = arith.constant 0 : i32
    %c0_i32_0 = arith.constant 0 : i32
    return %arg1, %arg0, %c0_i32 : i32, i32, i32
  }
  func.func @transform_1(%arg0: i32, %arg1: i32) -> (i32, i32) {
    %c0_i32 = arith.constant 0 : i32
    %c0_i32_0 = arith.constant 0 : i32
    %c0_i32_1 = arith.constant 0 : i32
    return %c0_i32, %c0_i32_0 : i32, i32
  }
  func.func @transform_2(%arg0: i32, %arg1: i32) -> (i32, i32) {
    %c0_i32 = arith.constant 0 : i32
    %c0_i32_0 = arith.constant 0 : i32
    %c0_i32_1 = arith.constant 0 : i32
    return %c0_i32, %c0_i32_0 : i32, i32
  }
  func.func @transform_3(%arg0: i32, %arg1: i32) -> (i32, i32, i32) {
    %c0_i32 = arith.constant 0 : i32
    %c0_i32_0 = arith.constant 0 : i32
    return %arg1, %arg0, %c0_i32 : i32, i32, i32
  }
}

</mosaic_0001>

<llo_original>
// kernel: tpu_custom_call.1
$region0: #{tpu_custom_call.1}
  #allocation0 [shape = 'u32[]', space=smem, size = 0x4, offset = 0x4, fixed_abs, tag = 'smem constant byte address 0x4 - core index']
  #allocation1 [shape = 'u32[144,128]{1,0:T(1,128)}', space=vmem, size = 0x12000, scoped, tag = 'internal scratch']
  #allocation2 [shape = 'f32[2,128]{1,0:T(2,128)}', space=vmem, size = 0x400, scoped, tag = 'scratch operand']
  %s0 = inlined_call_operand.hbm [shape: f32[2,2,128], index: 0, kind: input, shape index: {}]
  %s1 = inlined_call_operand.vmem [shape: f32[1,128], index: 1, kind: input, shape index: {}]
  %s2 = inlined_call_operand.vmem [shape: f32[1,128], index: 2, kind: input, shape index: {}]
  %s3 = inlined_call_operand.hbm [shape: f32[2,2,128], index: 3, kind: output, shape index: {}]
  %s4 = sld [smem:[#allocation0]]
  $region57: #{tpu_custom_call.1} parent=0
    _
  %s6 = ssub.s32 1, %s4
  %s7 = scalar_select 0, %s6, %s4
  $region1: #{tpu_custom_call.1} parent=0
    #allocation3 [shape = 'u8[2048]{0}', space=vmem, size = 0x800, scoped, tag = 'input window, operand 0']
    #allocation4 [shape = 's32[2]{0}', space=sflag, size = 0x8, scoped, tag = 'scoped memory for tpu_custom_call.1']
    #allocation5 [shape = 's32[2]{0}', space=sflag, size = 0x8, scoped, tag = 'scoped memory for tpu_custom_call.1']
    #allocation6 [shape = 'u8[2048]{0}', space=vmem, size = 0x800, scoped, tag = 'output window, operand 0']
    %8 = vsyncpa [#allocation4], 0
    %s9 = scalar_lea.sflag [#allocation4], 1
    %10 = vsyncpa %s9, 0
    %11 = vsyncpa [#allocation5], 0
    %s12 = scalar_lea.sflag [#allocation5], 1
    %13 = vsyncpa %s12, 0
    loop: start=0, step=1, limit=4
    $region2: #{tpu_custom_call.1} parent=1 // loop_pre_header
      _
    $region3: #{tpu_custom_call.1} parent=1 // loop_header
      %s15 = sphi 0, %s19
      %p16 = scmp.ge.s32.totalorder %s15, 4
      %s22 = sphi 0, %s34
      %s23 = sphi 0, %s30
      %s24 = sphi 0, %s22
      %s25 = sphi 0, %s23
      %s26 = sphi 0, %s24
      %s27 = sphi 0, %s25
      %s39 = sphi 0, %s41
      %s42 = sphi 0, %s39
      %s43 = sphi 0, %s42
      %s59 = sphi 0, %s43
      %s63 = sphi 0, %s63
      %s65 = sphi 0, %s63
      %s66 = sphi 0, %s65
      %s80 = sphi 0, %s66
      %s84 = sphi 0, %s84
      %s86 = sphi 0, %s84
      %s87 = sphi 0, %s86
      %s101 = sphi 0, %s87
      %s109 = sphi 0, %s111
      %s112 = sphi 0, %s109
      %s113 = sphi 0, %s112
      %s129 = sphi 0, %s113
    $region4: #{tpu_custom_call.1} parent=1 // loop_header_branch
      %18 = sbr.rel (%p16) target = $region8
    $region5: #{tpu_custom_call.1} parent=1 // loop_body
      %s20 = ssub.s32 %s15, 1
      %s21 = ssub.s32 %s15, 2
      %s28 = sadd.s32 1, %s23
      %p29 = scmp.ge.s32.totalorder %s28, 2
      %s30 = scalar_select %p29, 0, %s28
      %s31 = sadd.s32 1, %s22
      %s32 = scalar_select %p29, %s31, %s22
      %p33 = scmp.ge.s32.totalorder %s32, 1
      %s34 = scalar_select %p33, 0, %s32
      %s35 = ssub.s32 %s23, %s30
      %s36 = ssub.s32 %s22, %s34
      %s37 = sor.u32 %s35, %s36
      %p38 = scmp.eq.s32.totalorder %s37, 0
      %s40 = sadd.s32 %s39, 1
      %s41 = scalar_select %p38, %s39, %s40
      %p44 = pneg %p38
      %p45 = scmp.eq.s32.totalorder %s15, 1
      %p46 = por %p44, %p45
      %p47 = scmp.ne.s32.totalorder %s39, %s42
      %p48 = scmp.eq.s32.totalorder %s15, 0
      %p49 = por %p47, %p48
      %p50 = scmp.ne.s32.totalorder %s39, %s42
      %p51 = scmp.eq.s32.totalorder %s20, 1
      %p52 = por %p50, %p51
      %p53 = scmp.ne.s32.totalorder %s42, %s43
      %p54 = scmp.eq.s32.totalorder %s20, 0
      %p55 = por %p53, %p54
      %p56 = scmp.ne.s32.totalorder %s42, %s43
      %p57 = scmp.eq.s32.totalorder %s21, 1
      %p58 = por %p56, %p57
      %p60 = scmp.ne.s32.totalorder %s43, %s59
      %p61 = scmp.eq.s32.totalorder %s21, 0
      %p62 = por %p60, %p61
      %s64 = sadd.s32 %s63, 1
      %p67 = scmp.eq.s32.totalorder %s15, 1
      %p68 = scmp.ne.s32.totalorder %s63, %s65
      %p69 = scmp.eq.s32.totalorder %s15, 0
      %p70 = por %p68, %p69
      %p71 = scmp.ne.s32.totalorder %s63, %s65
      %p72 = scmp.eq.s32.totalorder %s20, 1
      %p73 = por %p71, %p72
      %p74 = scmp.ne.s32.totalorder %s65, %s66
      %p75 = scmp.eq.s32.totalorder %s20, 0
      %p76 = por %p74, %p75
      %p77 = scmp.ne.s32.totalorder %s65, %s66
      %p78 = scmp.eq.s32.totalorder %s21, 1
      %p79 = por %p77, %p78
      %p81 = scmp.ne.s32.totalorder %s66, %s80
      %p82 = scmp.eq.s32.totalorder %s21, 0
      %p83 = por %p81, %p82
      %s85 = sadd.s32 %s84, 1
      %p88 = scmp.eq.s32.totalorder %s15, 1
      %p89 = scmp.ne.s32.totalorder %s84, %s86
      %p90 = scmp.eq.s32.totalorder %s15, 0
      %p91 = por %p89, %p90
      %p92 = scmp.ne.s32.totalorder %s84, %s86
      %p93 = scmp.eq.s32.totalorder %s20, 1
      %p94 = por %p92, %p93
      %p95 = scmp.ne.s32.totalorder %s86, %s87
      %p96 = scmp.eq.s32.totalorder %s20, 0
      %p97 = por %p95, %p96
      %p98 = scmp.ne.s32.totalorder %s86, %s87
      %p99 = scmp.eq.s32.totalorder %s21, 1
      %p100 = por %p98, %p99
      %p102 = scmp.ne.s32.totalorder %s87, %s101
      %p103 = scmp.eq.s32.totalorder %s21, 0
      %p104 = por %p102, %p103
      %s105 = ssub.s32 %s23, %s30
      %s106 = ssub.s32 %s22, %s34
      %s107 = sor.u32 %s105, %s106
      %p108 = scmp.eq.s32.totalorder %s107, 0
      %s110 = sadd.s32 %s109, 1
      %s111 = scalar_select %p108, %s109, %s110
      %p114 = pneg %p108
      %p115 = scmp.eq.s32.totalorder %s15, 1
      %p116 = por %p114, %p115
      %p117 = scmp.ne.s32.totalorder %s109, %s112
      %p118 = scmp.eq.s32.totalorder %s15, 0
      %p119 = por %p117, %p118
      %p120 = scmp.ne.s32.totalorder %s109, %s112
      %p121 = scmp.eq.s32.totalorder %s20, 1
      %p122 = por %p120, %p121
      %p123 = scmp.ne.s32.totalorder %s112, %s113
      %p124 = scmp.eq.s32.totalorder %s20, 0
      %p125 = por %p123, %p124
      %p126 = scmp.ne.s32.totalorder %s112, %s113
      %p127 = scmp.eq.s32.totalorder %s21, 1
      %p128 = por %p126, %p127
      %p130 = scmp.ne.s32.totalorder %s113, %s129
      %p131 = scmp.eq.s32.totalorder %s21, 0
      %p132 = por %p130, %p131
      %p133 = scmp.le.s32.totalorder 1, %s15
      %p134 = scmp.lt.s32.totalorder %s15, 3
      %p135 = pnand %p133, %p134
      %p136 = pneg %p135
      // Predicated region
      $region9: #{tpu_custom_call.1} parent=5 // pred_check
        _
      $region10: #{tpu_custom_call.1} parent=5 // pred_check_branch
        %138 = sbr.rel (%p135) target = $region12
      $region11: #{tpu_custom_call.1} parent=5 // pred_region
        %s139 = ssub.s32 %s15, 1
        // Predicated region
        $region13: #{tpu_custom_call.1} parent=11 // pred_check
          %p140 = pneg %p76
        $region14: #{tpu_custom_call.1} parent=11 // pred_check_branch
          %142 = sbr.rel (%p140) target = $region16
        $region15: #{tpu_custom_call.1} parent=11 // pred_region
          _
        $region16: #{tpu_custom_call.1} parent=11 // pred_fallthru
          _
        // Predicated region
        $region17: #{tpu_custom_call.1} parent=11 // pred_check
          %p143 = pneg %p97
        $region18: #{tpu_custom_call.1} parent=11 // pred_check_branch
          %145 = sbr.rel (%p143) target = $region20
        $region19: #{tpu_custom_call.1} parent=11 // pred_region
          _
        $region20: #{tpu_custom_call.1} parent=11 // pred_fallthru
          _
      $region12: #{tpu_custom_call.1} parent=5 // pred_fallthru
        _
      %p146 = scmp.lt.s32.totalorder %s15, 2
      // Predicated region
      $region21: #{tpu_custom_call.1} parent=5 // pred_check
        %p147 = pneg %p146
      $region22: #{tpu_custom_call.1} parent=5 // pred_check_branch
        %149 = sbr.rel (%p147) target = $region24
      $region23: #{tpu_custom_call.1} parent=5 // pred_region
        // Predicated region
        $region25: #{tpu_custom_call.1} parent=23 // pred_check
          %p150 = pneg %p49
        $region26: #{tpu_custom_call.1} parent=23 // pred_check_branch
          %152 = sbr.rel (%p150) target = $region28
        $region27: #{tpu_custom_call.1} parent=23 // pred_region
          %s153 = sand.u32 %s39, 1
          %s154 = scalar_lea.sflag [#allocation4], %s153
          %s155 = sand.u32 %s39, 1
          %s156 = smul.addr %s155, 2
          %s157 = scalar_lea.vmem [#allocation3], %s156
          %s159 = ssub.s32 32, 32
          %160 = vsyncadd %s154, %s159
          %s161 = sadd.s32 %s22, %s23
          %s162 = smul.addr %s161, 32
          %s163 = scalar_lea.hbm %s0, %s162
          %s165 = sshll.u32 %s157, 4
          %s166 = int_to_ptr.vmem [resolvable:$true] %s165
          %168 = dma.hbm_to_vmem [thread:$0]  %s163, 32, %s166, %s154
        $region28: #{tpu_custom_call.1} parent=23 // pred_fallthru
          _
      $region24: #{tpu_custom_call.1} parent=5 // pred_fallthru
        _
      %p169 = scmp.le.s32.totalorder 1, %s15
      %p170 = scmp.lt.s32.totalorder %s15, 3
      %p171 = pnand %p169, %p170
      %p172 = pneg %p171
      // Predicated region
      $region29: #{tpu_custom_call.1} parent=5 // pred_check
        _
      $region30: #{tpu_custom_call.1} parent=5 // pred_check_branch
        %174 = sbr.rel (%p171) target = $region32
      $region31: #{tpu_custom_call.1} parent=5 // pred_region
        %s175 = ssub.s32 %s15, 1
        %s176 = sand.u32 %s42, 1
        %s177 = scalar_lea.sflag [#allocation4], %s176
        %s178 = sand.u32 %s42, 1
        %s179 = smul.addr %s178, 2
        %s180 = scalar_lea.vmem [#allocation3], %s179
        // Predicated region
        $region33: #{tpu_custom_call.1} parent=31 // pred_check
          %p181 = pneg %p55
        $region34: #{tpu_custom_call.1} parent=31 // pred_check_branch
          %183 = sbr.rel (%p181) target = $region36
        $region35: #{tpu_custom_call.1} parent=31 // pred_region
          %184 = dma.done %s177, 32
        $region36: #{tpu_custom_call.1} parent=31 // pred_fallthru
          _
        %s185 = sand.u32 %s42, 1
        %s186 = scalar_lea.sflag [#allocation4], %s185
        %s187 = sand.u32 %s42, 1
        %s188 = smul.addr %s187, 2
        %s189 = scalar_lea.vmem [#allocation3], %s188
        %p190 = pneg %p55
        %p191 = pneg %p52
        %p192 = pneg %p76
        %p193 = pneg %p73
        %p194 = pneg %p97
        %p195 = pneg %p94
        %p196 = pneg %p125
        %p197 = pneg %p122
        %s198 = sand.u32 %s112, 1
        %s199 = scalar_lea.sflag [#allocation5], %s198
        %s200 = sand.u32 %s112, 1
        %s201 = smul.addr %s200, 2
        %s202 = scalar_lea.vmem [#allocation6], %s201
        %p203 = scmp.eq.s32.totalorder %s25, 0
        // Predicated region
        $region37: #{tpu_custom_call.1} parent=31 // pred_check
          %p204 = pneg %p203
        $region38: #{tpu_custom_call.1} parent=31 // pred_check_branch
          %206 = sbr.rel (%p204) target = $region40
        $region39: #{tpu_custom_call.1} parent=31 // pred_region
          %v207 = vlaneseq
          %v208 = vshrl.u32 %v207, 7
          %s209 = smul.u32 %s24, 2
          %v210 = vstv %s209
          %v211 = vadd.s32 %v208, %v210
          %v212 = vmul.u32 %v211, 4
          %v213 = vcvt.s32.f32 %v212
          %v214 = vld [vmem:[%s1] sm:$0x1]
          %v216 = vlaneseq
          %v217 = vshrl.u32 %v216, 7
          %v218 = vsub.s32 0, %v217
          %v219 = vrot.slane %v214, %v218
          %v221 = vmul.f32 %v213, %v219
          %v222 = vld [vmem:[%s2] sm:$0x1]
          %v224 = vlaneseq
          %v225 = vshrl.u32 %v224, 7
          %v226 = vsub.s32 0, %v225
          %v227 = vrot.slane %v222, %v226
          %v229 = vadd.f32 %v221, %v227
          %v230 = vand.u32 2147483647, %v229
          %vm231 = vcmp.le.f32.partialorder %v230, 0.7853982
          %vm232 = vcmp.lt.s32.totalorder %v229, 0
          %v233 = vand.u32 %v229, 2139095040
          %v234 = vshrl.u32 %v233, 23
          %v235 = vsub.s32 %v234, 127
          %v236 = vand.u32 2147483647, %v229
          %v237 = vand.u32 %v236, 8388607
          %v238 = vor.u32 %v237, 8388608
          %v239 = vsub.s32 0, %v238
          %v240 = vadd.s32 %v235, 1
          %vm241 = vcmp.gt.s32.totalorder %v240, 0
          %v242 = vsel %vm241, %v240, 0
          %v243 = vshrl.u32 %v242, 5
          %v244 = vand.u32 %v242, 31
          %v245 = vsub.s32 32, %v244
          %v246 = vshrl.u32 683565275, %v245
          %v247 = vshll.u32 683565275, %v244
          %v248 = vshrl.u32 2475754826, %v245
          %v249 = vor.u32 %v247, %v248
          %v250 = vshll.u32 2475754826, %v244
          %v251 = vshrl.u32 2131351028, %v245
          %v252 = vor.u32 %v250, %v251
          %v253 = vshll.u32 2131351028, %v244
          %v254 = vshrl.u32 2102212464, %v245
          %v255 = vor.u32 %v253, %v254
          %v256 = vshll.u32 2102212464, %v244
          %v257 = vshrl.u32 920167782, %v245
          %v258 = vor.u32 %v256, %v257
          %v259 = vshll.u32 920167782, %v244
          %v260 = vshrl.u32 1326507024, %v245
          %v261 = vor.u32 %v259, %v260
          %vm262 = vcmp.lt.s32.totalorder %v243, 1
          %vm263 = vcmp.lt.s32.totalorder %v243, 2
          %vm264 = vcmp.lt.s32.totalorder %v243, 3
          %vm265 = vcmp.lt.s32.totalorder %v243, 4
          %v266 = vsel %vm262, %v246, %v249
          %v267 = vsel %vm265, %v255, 2102212464
          %v268 = vsel %vm264, %v252, %v267
          %v269 = vsel %vm263, %v266, %v268
          %v270 = vsel %vm262, %v249, %v252
          %v271 = vsel %vm265, %v258, 920167782
          %v272 = vsel %vm264, %v255, %v271
          %v273 = vsel %vm263, %v270, %v272
          %v274 = vsel %vm262, %v252, %v255
          %v275 = vsel %vm265, %v261, 1326507024
          %v276 = vsel %vm264, %v258, %v275
          %v277 = vsel %vm263, %v274, %v276
          %v278 = vshll.u32 %v238, 8
          %v279 = vmul.u32.u64.compose %v278, %v277
          %v280 = vextract.low.u32 %v279
          %v281 = vextract.high.u32 %v279
          %v282 = vmul.u32.u64.compose %v278, %v273
          %v283 = vextract.low.u32 %v282
          %v284 = vextract.high.u32 %v282
          %v285 = vmul.u32 %v278, %v269
          %v286 = vadd.s32 %v281, %v283
          %vm287 = vc.u32 %v281, %v283
          %v288 = vadd.s32 %v284, 1
          %v289 = vsel %vm287, %v288, %v284
          %v290 = vadd.s32 %v285, %v289
          %v291 = vadd.s32 %v290, 536870912
          %v292 = vshrl.u32 %v291, 30
          %v293 = vshll.u32 %v292, 30
          %v294 = vsub.s32 %v290, %v293
          %vm295 = vcmp.lt.s32.totalorder %v294, 0
          %v296 = vsub.s32 0, %v294
          %v297 = vsel %vm295, %v296, %v294
          %v298 = vclz %v297
          %v299 = vsub.s32 %v298, 2
          %vm300 = vcmp.gt.s32.totalorder 0, %v299
          %v301 = vsel %vm300, 0, %v299
          %v302 = vsub.s32 32, %v301
          %v303 = vshll.u32 %v294, %v301
          %v304 = vshrl.u32 %v286, %v302
          %v305 = vor.u32 %v303, %v304
          %v306 = vsub.s32 4294967266, %v301
          %v307 = vadd.s32 %v306, 127
          %v308 = vshll.u32 %v307, 23
          %v309 = vor.u32 4788187, %v308
          %v310 = vand.u32 2147483647, %v309
          %v312 = vcvt.s32.f32 %v305
          %v313 = vmul.f32 %v312, %v310
          %v314 = vxor.u32 %v313, 2147483648
          %v315 = vsel %vm232, %v314, %v313
          %v316 = vsub.s32 4, %v292
          %v317 = vsel %vm232, %v316, %v292
          %v318 = vsel %vm231, %v229, %v315
          %v319 = vsel %vm231, 0, %v317
          %v320 = vcosq.f32.pop %v318
          %v321 = vsinq.f32.pop %v318
          %vm322 = vweird.f32 %v229
          %v323 = vadd.s32 %v319, 3
          %v324 = vand.u32 %v323, 3
          %vm325 = vcmp.lt.s32.totalorder %v324, 2
          %vm326 = vcmp.eq.s32.totalorder %v324, 0
          %v327 = vxor.u32 %v321, 2147483648
          %v328 = vsel %vm326, %v320, %v327
          %vm329 = vcmp.eq.s32.totalorder %v324, 2
          %v330 = vxor.u32 %v320, 2147483648
          %v331 = vsel %vm329, %v330, %v321
          %v332 = vsel %vm325, %v328, %v331
          %v333 = vsel %vm322, nan, %v332
          %334 = vst [vmem:[#allocation2] sm:$0x3] %v333
          %v335 = vld [vmem:[%s180] sm:$0x3]
          %v336 = vadd.f32 %v335, %v333
          %337 = vst [vmem:[%s202] sm:$0x3] %v336
        $region40: #{tpu_custom_call.1} parent=31 // pred_fallthru
          _
        %p338 = scmp.ne.s32.totalorder %s25, 0
        // Predicated region
        $region41: #{tpu_custom_call.1} parent=31 // pred_check
          %p339 = pneg %p338
        $region42: #{tpu_custom_call.1} parent=31 // pred_check_branch
          %341 = sbr.rel (%p339) target = $region44
        $region43: #{tpu_custom_call.1} parent=31 // pred_region
          %v342 = vld [vmem:[%s180] sm:$0x3]
          %v343 = vld [vmem:[#allocation2] sm:$0x3]
          %v344 = vadd.f32 %v342, %v343
          %345 = vst [vmem:[%s202] sm:$0x3] %v344
        $region44: #{tpu_custom_call.1} parent=31 // pred_fallthru
          _
        %s346 = sand.u32 %s112, 1
        %s347 = scalar_lea.sflag [#allocation5], %s346
        %s348 = sand.u32 %s112, 1
        %s349 = smul.addr %s348, 2
        %s350 = scalar_lea.vmem [#allocation6], %s349
        // Predicated region
        $region45: #{tpu_custom_call.1} parent=31 // pred_check
          %p351 = pneg %p122
        $region46: #{tpu_custom_call.1} parent=31 // pred_check_branch
          %353 = sbr.rel (%p351) target = $region48
        $region47: #{tpu_custom_call.1} parent=31 // pred_region
          %s355 = ssub.s32 32, 32
          %356 = vsyncadd %s347, %s355
          %s357 = sadd.s32 %s24, %s25
          %s358 = smul.addr %s357, 32
          %s359 = scalar_lea.hbm %s3, %s358
          %s361 = sshll.u32 %s350, 4
          %s362 = int_to_ptr.vmem [resolvable:$true] %s361
          %364 = dma.vmem_to_hbm [thread:$0]  %s362, 32, %s359, %s347
        $region48: #{tpu_custom_call.1} parent=31 // pred_fallthru
          _
      $region32: #{tpu_custom_call.1} parent=5 // pred_fallthru
        _
      %p365 = scmp.le.s32.totalorder 2, %s15
      // Predicated region
      $region49: #{tpu_custom_call.1} parent=5 // pred_check
        %p366 = pneg %p365
      $region50: #{tpu_custom_call.1} parent=5 // pred_check_branch
        %368 = sbr.rel (%p366) target = $region52
      $region51: #{tpu_custom_call.1} parent=5 // pred_region
        %s369 = ssub.s32 %s15, 2
        // Predicated region
        $region53: #{tpu_custom_call.1} parent=51 // pred_check
          %p370 = pneg %p128
        $region54: #{tpu_custom_call.1} parent=51 // pred_check_branch
          %372 = sbr.rel (%p370) target = $region56
        $region55: #{tpu_custom_call.1} parent=51 // pred_region
          %s373 = sand.u32 %s113, 1
          %s374 = scalar_lea.sflag [#allocation5], %s373
          %s375 = sand.u32 %s113, 1
          %s376 = smul.addr %s375, 2
          %s377 = scalar_lea.vmem [#allocation6], %s376
          %378 = dma.done %s374, 32
        $region56: #{tpu_custom_call.1} parent=51 // pred_fallthru
          _
      $region52: #{tpu_custom_call.1} parent=5 // pred_fallthru
        _
    $region6: #{tpu_custom_call.1} parent=1 // loop_footer
      %s19 = sadd.s32 1, %s15
    $region7: #{tpu_custom_call.1} parent=1 // loop_footer_branch
      %14 = sbr.rel target = $region3
    $region8: #{tpu_custom_call.1} parent=1 // loop_exit
      _
    %379 = vsyncpa [#allocation4], 1
    %s380 = scalar_lea.sflag [#allocation4], 1
    %381 = vsyncpa %s380, 1
    %382 = vsyncpa [#allocation5], 1
    %s383 = scalar_lea.sflag [#allocation5], 1
    %384 = vsyncpa %s383, 1

</llo_original>
